<compile_context>
chip_gen: v5e
topology: v5e:2x2
jax: 0.10.0
libtpu: 0.0.40
codegen_flags: <defaults>
</compile_context>

<pallas_src>
from functools import partial

import jax
import jax.numpy as jnp
from jax import lax
from jax.experimental import pallas as pl
from jax.experimental.pallas import tpu as pltpu


_TARGET_BLOCK_BYTES = 2 * 1024 * 1024   # ~2 MiB input blocks: >=85% of HBM roofline
_VMEM_LIMIT_CAP = 32 * 1024 * 1024      # safe on v5e/v6e (128 MiB) and v7x (64 MiB/TC)


def _layernorm_rows_kernel(x_ref, alpha_ref, bias_ref, out_ref, *, eps, features):
    # Row-wise path (used when D >= 128, i.e. already lane-dense).
    # x_ref: (Tt, D), alpha_ref/bias_ref: (1, D), out_ref: (Tt, D)
    x = x_ref[...].astype(jnp.float32)
    mean = jnp.mean(x, axis=-1, keepdims=True)
    diff = x - mean
    # torch.Tensor.std default is the unbiased estimator (divide by N-1).
    var = jnp.sum(diff * diff, axis=-1, keepdims=True) * (1.0 / (features - 1))
    # Per-row (Tt,1) reciprocal instead of a full-tile divide (~D x fewer divides).
    inv = 1.0 / (jnp.sqrt(var) + eps)
    y = alpha_ref[...] * (diff * inv) + bias_ref[...]
    out_ref[...] = y.astype(out_ref.dtype)


def _layernorm_lane_packed_kernel(x_ref, seg_ref, alpha_ref, bias_ref, out_ref,
                                  *, eps, features):
    # Lane-packed path (D < 128): G = 128 // D tokens per 128-lane row.
    # x_ref: (Tt, 128); seg_ref: (128, 128) block-diagonal ones (segmented
    # sum-and-broadcast matrix); alpha_ref/bias_ref: (1, 128) = params tiled G x.
    x = x_ref[...].astype(jnp.float32)
    seg = seg_ref[...]
    # Per-token (per D-lane segment) sum, broadcast back to every lane of the
    # segment, via the otherwise-idle MXU.  HIGHEST precision keeps it at f32
    # accuracy (the op is DMA-bound, the extra MXU passes are hidden).
    seg_sum = jnp.dot(x, seg, preferred_element_type=jnp.float32,
                      precision=lax.Precision.HIGHEST)
    mean = seg_sum * (1.0 / features)
    diff = x - mean
    seg_sq = jnp.dot(diff * diff, seg, preferred_element_type=jnp.float32,
                     precision=lax.Precision.HIGHEST)
    # Unbiased (N-1) estimator, matching torch.Tensor.std.
    std = jnp.sqrt(seg_sq * (1.0 / (features - 1)))
    # std is already lane-broadcast per segment; the divide is hidden under DMA.
    y = alpha_ref[...] * (diff / (std + eps)) + bias_ref[...]
    out_ref[...] = y.astype(out_ref.dtype)


def layer_normalization(x, alpha, bias, *, eps=1e-6):
    """Pallas equivalent of LayerNormalization.forward for x of shape (..., D)."""
    orig_shape = x.shape
    D = orig_shape[-1]
    T = 1
    for d in orig_shape[:-1]:
        T *= d
    itemsize = jnp.dtype(x.dtype).itemsize

    alpha = alpha.astype(jnp.float32).reshape(1, D)
    bias = bias.astype(jnp.float32).reshape(1, D)

    # Lane-dense repack when D < 128: fold 128//D consecutive tokens into the
    # lane dimension so every load/store uses all 128 lanes (unmasked vst).
    use_packed = (D > 1) and (D < 128) and (128 % D == 0) and ((T * D) % 128 == 0)

    if use_packed:
        G = 128 // D
        rows, lane = (T * D) // 128, 128
        x2 = x.reshape(rows, lane)            # contiguous reshape: no HBM copy
        alpha_in = jnp.tile(alpha, (1, G))
        bias_in = jnp.tile(bias, (1, G))
        lanes = jnp.arange(lane, dtype=jnp.int32)
        seg = (lanes[:, None] // D == lanes[None, :] // D).astype(jnp.float32)
    else:
        rows, lane = T, D
        x2 = x.reshape(rows, lane)
        alpha_in, bias_in = alpha, bias

    # Tile the row axis by a VMEM byte budget (not a fixed token count).
    tile_r = max(8, (_TARGET_BLOCK_BYTES // (lane * itemsize)) // 8 * 8)
    if tile_r >= rows:
        tile_r = rows                          # single full-extent block (always legal)
    grid = (pl.cdiv(rows, tile_r),)            # last partial block clipped by Pallas:
                                               # no wrapper-side pad / slice copies.

    # Explicit scoped-VMEM limit: in/out double-buffered blocks + f32 temporaries,
    # with headroom, capped for v7x (and well above v5e's 16 MiB default).
    block_bytes = tile_r * lane * itemsize
    f32_bytes = tile_r * lane * 4
    vmem_limit = int(min(_VMEM_LIMIT_CAP,
                         max(4 * block_bytes + 8 * f32_bytes + (1 << 20), 4 << 20)))

    if use_packed:
        flops = 4 * rows * lane * lane + 10 * rows * lane   # 2 MXU matmuls + elementwise
        transcendentals = rows * lane
    else:
        flops = 10 * rows * lane
        transcendentals = 2 * rows
    cost = pl.CostEstimate(
        flops=int(flops),
        transcendentals=int(transcendentals),
        bytes_accessed=int(2 * rows * lane * itemsize + 8 * lane),
    )

    common = dict(
        out_shape=jax.ShapeDtypeStruct((rows, lane), x.dtype),
        grid=grid,
        out_specs=pl.BlockSpec((tile_r, lane), lambda i: (i, 0)),
        compiler_params=pltpu.CompilerParams(
            # TODO(synk): verify in a profile that this splits across v7x's 2 TCs;
            # if not, switch to an explicit pl.core_map over a tensorcore mesh.
            dimension_semantics=("parallel",),
            vmem_limit_bytes=vmem_limit),
        cost_estimate=cost,
    )

    if use_packed:
        out = pl.pallas_call(
            partial(_layernorm_lane_packed_kernel, eps=float(eps), features=D),
            in_specs=[
                pl.BlockSpec((tile_r, lane), lambda i: (i, 0)),   # packed token rows
                pl.BlockSpec((lane, lane), lambda i: (0, 0)),     # segment matrix (constant)
                pl.BlockSpec((1, lane), lambda i: (0, 0)),        # alpha (tiled)
                pl.BlockSpec((1, lane), lambda i: (0, 0)),        # bias  (tiled)
            ],
            **common,
        )(x2, seg, alpha_in, bias_in)
    else:
        out = pl.pallas_call(
            partial(_layernorm_rows_kernel, eps=float(eps), features=D),
            in_specs=[
                pl.BlockSpec((tile_r, lane), lambda i: (i, 0)),   # token rows
                pl.BlockSpec((1, lane), lambda i: (0, 0)),        # alpha
                pl.BlockSpec((1, lane), lambda i: (0, 0)),        # bias
            ],
            **common,
        )(x2, alpha_in, bias_in)

    return out.reshape(orig_shape)


def encoder_forward(x, mask, layer_fns, alpha, bias, *, eps=1e-6):
    """Encoder.forward: apply each layer, then the final LayerNormalization."""
    # TODO(synk): EncoderBlock contents (attention/FFN) are not defined in the
    # provided spec; layers are applied as opaque callables (x, mask) -> x.
    # Once they are real kernels, this final LN should be fused into the last
    # block's epilogue to avoid an extra activation round trip through HBM.
    for layer in layer_fns:
        x = layer(x, mask)
    return layer_normalization(x, alpha, bias, eps=eps)


if __name__ == "__main__":
    EPS = 1e-6
    key = jax.random.PRNGKey(0)
    k1, k2, k3 = jax.random.split(key, 3)

    # Encoder-sized toy problem: batch=2, seq=8, features=32
    # (D < 128 -> exercises the lane-packed kernel path).
    B, S, D = 2, 8, 32
    x = jax.random.normal(k1, (B, S, D), dtype=jnp.float32)
    mask = jnp.ones((B, 1, 1, S), dtype=jnp.float32)
    alpha = jnp.ones((D,), dtype=jnp.float32)    # LayerNormalization init
    bias = jnp.zeros((D,), dtype=jnp.float32)
    layer_fns = []                               # no EncoderBlock definitions in the spec

    out = encoder_forward(x, mask, layer_fns, alpha, bias, eps=EPS)
    out = jax.block_until_ready(out)

    mean = jnp.mean(x, axis=-1, keepdims=True)
    std = jnp.std(x, axis=-1, keepdims=True, ddof=1)   # unbiased, like torch
    ref = alpha * (x - mean) / (std + EPS) + bias
    assert out.shape == (B, S, D)
    assert jnp.allclose(out, ref, atol=1e-5, rtol=1e-5)

    # Second check exercising the row-wise (D multiple of 128, lane-dense) path
    # with non-trivial alpha/bias.
    B2, S2, D2 = 2, 16, 128
    x2 = jax.random.normal(k2, (B2, S2, D2), dtype=jnp.float32)
    alpha2 = 1.0 + 0.1 * jax.random.normal(k3, (D2,), dtype=jnp.float32)
    bias2 = 0.1 * jnp.arange(D2, dtype=jnp.float32) / D2
    out2 = jax.block_until_ready(layer_normalization(x2, alpha2, bias2, eps=EPS))
    mean2 = jnp.mean(x2, axis=-1, keepdims=True)
    std2 = jnp.std(x2, axis=-1, keepdims=True, ddof=1)
    ref2 = alpha2 * (x2 - mean2) / (std2 + EPS) + bias2
    assert jnp.allclose(out2, ref2, atol=1e-5, rtol=1e-5)

    print("KERNEL_OK")
</pallas_src>

<mosaic_0001>
module attributes {stable_mosaic.version = 11 : i64} {
  func.func @_layernorm_lane_packed_kernel(%arg0: i32, %arg1: memref<4x128xf32, #tpu.memory_space<vmem>>, %arg2: memref<128x128xf32, #tpu.memory_space<vmem>>, %arg3: memref<1x128xf32, #tpu.memory_space<vmem>>, %arg4: memref<1x128xf32, #tpu.memory_space<vmem>>, %arg5: memref<4x128xf32, #tpu.memory_space<vmem>>) attributes {dimension_semantics = [#tpu.dimension_semantics<parallel>], iteration_bounds = array<i64: 1>, scalar_prefetch = 0 : i64, scratch_operands = 0 : i64, tpu.core_type = #tpu.core_type<tc>, window_params = [{transform_indices = @transform_0, window_bounds = array<i64: 4, 128>}, {pipeline_mode = #tpu.pipeline_mode<synchronous>, transform_indices = @transform_1, window_bounds = array<i64: 128, 128>}, {pipeline_mode = #tpu.pipeline_mode<synchronous>, transform_indices = @transform_2, window_bounds = array<i64: 1, 128>}, {pipeline_mode = #tpu.pipeline_mode<synchronous>, transform_indices = @transform_3, window_bounds = array<i64: 1, 128>}, {transform_indices = @transform_4, window_bounds = array<i64: 4, 128>}]} {
    %c0 = arith.constant 0 : index
    %c0_0 = arith.constant 0 : index
    %0 = vector.load %arg1[%c0, %c0_0] : memref<4x128xf32, #tpu.memory_space<vmem>>, vector<4x128xf32>
    %c0_1 = arith.constant 0 : index
    %c0_2 = arith.constant 0 : index
    %1 = vector.load %arg2[%c0_1, %c0_2] : memref<128x128xf32, #tpu.memory_space<vmem>>, vector<128x128xf32>
    %cst = arith.constant dense<0.000000e+00> : vector<4x128xf32>
    %2 = tpu.matmul %0, %1, %cst {dimension_numbers = #tpu.dot_dimension_numbers<[1], [0], [0], [1], [0, 0, 1, 1], [], []>, precision = #tpu.contract_precision<fp32>} : vector<4x128xf32>, vector<128x128xf32>, vector<4x128xf32> -> vector<4x128xf32>
    %cst_3 = arith.constant 3.125000e-02 : f32
    %3 = vector.broadcast %cst_3 : f32 to vector<4x128xf32>
    %4 = arith.mulf %2, %3 : vector<4x128xf32>
    %5 = arith.subf %0, %4 : vector<4x128xf32>
    %6 = arith.mulf %5, %5 : vector<4x128xf32>
    %cst_4 = arith.constant dense<0.000000e+00> : vector<4x128xf32>
    %7 = tpu.matmul %6, %1, %cst_4 {dimension_numbers = #tpu.dot_dimension_numbers<[1], [0], [0], [1], [0, 0, 1, 1], [], []>, precision = #tpu.contract_precision<fp32>} : vector<4x128xf32>, vector<128x128xf32>, vector<4x128xf32> -> vector<4x128xf32>
    %cst_5 = arith.constant 0.0322580636 : f32
    %8 = vector.broadcast %cst_5 : f32 to vector<4x128xf32>
    %9 = arith.mulf %7, %8 : vector<4x128xf32>
    %10 = math.sqrt %9 : vector<4x128xf32>
    %c0_6 = arith.constant 0 : index
    %c0_7 = arith.constant 0 : index
    %11 = vector.load %arg3[%c0_6, %c0_7] : memref<1x128xf32, #tpu.memory_space<vmem>>, vector<1x128xf32>
    %cst_8 = arith.constant 9.99999997E-7 : f32
    %12 = vector.broadcast %cst_8 : f32 to vector<4x128xf32>
    %13 = arith.addf %10, %12 : vector<4x128xf32>
    %14 = arith.divf %5, %13 : vector<4x128xf32>
    %15 = vector.broadcast %11 : vector<1x128xf32> to vector<4x128xf32>
    %16 = arith.mulf %15, %14 : vector<4x128xf32>
    %c0_9 = arith.constant 0 : index
    %c0_10 = arith.constant 0 : index
    %17 = vector.load %arg4[%c0_9, %c0_10] : memref<1x128xf32, #tpu.memory_space<vmem>>, vector<1x128xf32>
    %18 = vector.broadcast %17 : vector<1x128xf32> to vector<4x128xf32>
    %19 = arith.addf %16, %18 : vector<4x128xf32>
    %c0_11 = arith.constant 0 : index
    %c0_12 = arith.constant 0 : index
    %20 = vector.load %arg5[%c0_11, %c0_12] : memref<4x128xf32, #tpu.memory_space<vmem>>, vector<4x128xf32>
    tpu.vector_store %arg5[%c0_11, %c0_12], %19 {strides = array<i32>} : memref<4x128xf32, #tpu.memory_space<vmem>>, vector<4x128xf32>,
    return
  }
  func.func @transform_0(%arg0: i32) -> (i32, i32) {
    %c0_i32 = arith.constant 0 : i32
    %c0_i32_0 = arith.constant 0 : i32
    return %arg0, %c0_i32 : i32, i32
  }
  func.func @transform_1(%arg0: i32) -> (i32, i32) {
    %c0_i32 = arith.constant 0 : i32
    %c0_i32_0 = arith.constant 0 : i32
    %c0_i32_1 = arith.constant 0 : i32
    return %c0_i32, %c0_i32_0 : i32, i32
  }
  func.func @transform_2(%arg0: i32) -> (i32, i32) {
    %c0_i32 = arith.constant 0 : i32
    %c0_i32_0 = arith.constant 0 : i32
    %c0_i32_1 = arith.constant 0 : i32
    return %c0_i32, %c0_i32_0 : i32, i32
  }
  func.func @transform_3(%arg0: i32) -> (i32, i32) {
    %c0_i32 = arith.constant 0 : i32
    %c0_i32_0 = arith.constant 0 : i32
    %c0_i32_1 = arith.constant 0 : i32
    return %c0_i32, %c0_i32_0 : i32, i32
  }
  func.func @transform_4(%arg0: i32) -> (i32, i32) {
    %c0_i32 = arith.constant 0 : i32
    %c0_i32_0 = arith.constant 0 : i32
    return %arg0, %c0_i32 : i32, i32
  }
}

</mosaic_0001>

<llo_original>
// kernel: tpu_custom_call.1
$region0: #{tpu_custom_call.1}
  #allocation0 [shape = 'u32[]', space=smem, size = 0x4, offset = 0x4, fixed_abs, tag = 'smem constant byte address 0x4 - core index']
  #allocation1 [shape = 'u32[72,128]{1,0:T(1,128)}', space=vmem, size = 0x9000, scoped, tag = 'internal scratch']
  %s0 = inlined_call_operand.hbm [shape: f32[4,128], index: 0, kind: input, shape index: {}]
  %s1 = inlined_call_operand.hbm [shape: f32[128,128], index: 1, kind: input, shape index: {}]
  %s2 = inlined_call_operand.vmem [shape: f32[1,128], index: 2, kind: input, shape index: {}]
  %s3 = inlined_call_operand.vmem [shape: f32[1,128], index: 3, kind: input, shape index: {}]
  %s4 = inlined_call_operand.hbm [shape: f32[4,128], index: 4, kind: output, shape index: {}]
  %s5 = sld [smem:[#allocation0]]
  $region34: #{tpu_custom_call.1} parent=0
    _
  %s7 = ssub.s32 1, %s5
  %s8 = scalar_select 0, %s7, %s5
  $region1: #{tpu_custom_call.1} parent=0
    #allocation2 [shape = 'u8[2048]{0}', space=vmem, size = 0x800, scoped, tag = 'input window, operand 0, single buffered']
    #allocation3 [shape = 's32[1]{0}', space=sflag, size = 0x4, scoped, tag = 'scoped memory for tpu_custom_call.1']
    #allocation4 [shape = 's32[1]{0}', space=sflag, size = 0x4, scoped, tag = 'scoped memory for tpu_custom_call.1']
    #allocation5 [shape = 'u8[65536]{0}', space=vmem, size = 0x10000, scoped, tag = 'input window, operand 1, single buffered']
    #allocation6 [shape = 's32[1]{0}', space=sflag, size = 0x4, scoped, tag = 'scoped memory for tpu_custom_call.1']
    #allocation7 [shape = 'u8[2048]{0}', space=vmem, size = 0x800, scoped, tag = 'output window, operand 0, single buffered']
    %9 = vsyncpa [#allocation3], 0
    %10 = vsyncpa [#allocation6], 0
    %11 = vsyncpa [#allocation4], 0
    // Predicated region
    $region2: #{tpu_custom_call.1} parent=1 // pred_check
      _
    $region3: #{tpu_custom_call.1} parent=1 // pred_check_branch
      %13 = sbr.rel (0) target = $region5
    $region4: #{tpu_custom_call.1} parent=1 // pred_region
      %15 = vsyncadd [#allocation3], 0
      %s17 = sshll.u32 %s0, 4
      %s18 = int_to_ptr.hbm [resolvable:$true] %s17
      %s19 = sshll.u32 [#allocation2], 4
      %s20 = int_to_ptr.vmem [resolvable:$true] %s19
      %22 = dma.hbm_to_vmem [thread:$0]  %s18, 64, %s20, [#allocation3]
    $region5: #{tpu_custom_call.1} parent=1 // pred_fallthru
      _
    // Predicated region
    $region6: #{tpu_custom_call.1} parent=1 // pred_check
      _
    $region7: #{tpu_custom_call.1} parent=1 // pred_check_branch
      %24 = sbr.rel (0) target = $region9
    $region8: #{tpu_custom_call.1} parent=1 // pred_region
      %26 = vsyncadd [#allocation6], 0
      %s27 = sshll.u32 %s1, 4
      %s28 = int_to_ptr.hbm [resolvable:$true] %s27
      %s29 = sshll.u32 [#allocation5], 4
      %s30 = int_to_ptr.vmem [resolvable:$true] %s29
      %35 = dma.hbm_to_vmem [thread:$0]  %s28, 2048, %s30, [#allocation6], 128, 128, 8
    $region9: #{tpu_custom_call.1} parent=1 // pred_fallthru
      _
    // Predicated region
    $region10: #{tpu_custom_call.1} parent=1 // pred_check
      _
    $region11: #{tpu_custom_call.1} parent=1 // pred_check_branch
      %37 = sbr.rel (0) target = $region13
    $region12: #{tpu_custom_call.1} parent=1 // pred_region
      _
    $region13: #{tpu_custom_call.1} parent=1 // pred_fallthru
      _
    // Predicated region
    $region14: #{tpu_custom_call.1} parent=1 // pred_check
      _
    $region15: #{tpu_custom_call.1} parent=1 // pred_check_branch
      %39 = sbr.rel (0) target = $region17
    $region16: #{tpu_custom_call.1} parent=1 // pred_region
      _
    $region17: #{tpu_custom_call.1} parent=1 // pred_fallthru
      _
    // Predicated region
    $region18: #{tpu_custom_call.1} parent=1 // pred_check
      _
    $region19: #{tpu_custom_call.1} parent=1 // pred_check_branch
      %41 = sbr.rel (0) target = $region21
    $region20: #{tpu_custom_call.1} parent=1 // pred_region
      %43 = dma.done [#allocation3], 64
    $region21: #{tpu_custom_call.1} parent=1 // pred_fallthru
      _
    // Predicated region
    $region22: #{tpu_custom_call.1} parent=1 // pred_check
      _
    $region23: #{tpu_custom_call.1} parent=1 // pred_check_branch
      %45 = sbr.rel (0) target = $region25
    $region24: #{tpu_custom_call.1} parent=1 // pred_region
      %47 = dma.done [#allocation6], 2048
    $region25: #{tpu_custom_call.1} parent=1 // pred_fallthru
      _
    %v48 = vld [vmem:[#allocation2] sm:$0xf]
    %v49 = vld [vmem:[#allocation5] sm:$0xff]
    %v50 = vld [vmem:[#allocation5 + $0x8] sm:$0xff]
    %v51 = vld [vmem:[#allocation5 + $0x10] sm:$0xff]
    %v52 = vld [vmem:[#allocation5 + $0x18] sm:$0xff]
    %v53 = vld [vmem:[#allocation5 + $0x20] sm:$0xff]
    %v54 = vld [vmem:[#allocation5 + $0x28] sm:$0xff]
    %v55 = vld [vmem:[#allocation5 + $0x30] sm:$0xff]
    %v56 = vld [vmem:[#allocation5 + $0x38] sm:$0xff]
    %v57 = vld [vmem:[#allocation5 + $0x40] sm:$0xff]
    %v58 = vld [vmem:[#allocation5 + $0x48] sm:$0xff]
    %v59 = vld [vmem:[#allocation5 + $0x50] sm:$0xff]
    %v60 = vld [vmem:[#allocation5 + $0x58] sm:$0xff]
    %v61 = vld [vmem:[#allocation5 + $0x60] sm:$0xff]
    %v62 = vld [vmem:[#allocation5 + $0x68] sm:$0xff]
    %v63 = vld [vmem:[#allocation5 + $0x70] sm:$0xff]
    %v64 = vld [vmem:[#allocation5 + $0x78] sm:$0xff]
    %v65 = vand.u32 %v64, 4294901760
    %66 = vmatpush.msra.mxu0 %v65
    %v67 = vand.u32 %v63, 4294901760
    %68 = vmatpush.msra.mxu0 %v67
    %v69 = vand.u32 %v62, 4294901760
    %70 = vmatpush.msra.mxu0 %v69
    %v71 = vand.u32 %v61, 4294901760
    %72 = vmatpush.msra.mxu0 %v71
    %v73 = vand.u32 %v60, 4294901760
    %74 = vmatpush.msra.mxu0 %v73
    %v75 = vand.u32 %v59, 4294901760
    %76 = vmatpush.msra.mxu0 %v75
    %v77 = vand.u32 %v58, 4294901760
    %78 = vmatpush.msra.mxu0 %v77
    %v79 = vand.u32 %v57, 4294901760
    %80 = vmatpush.msra.mxu0 %v79
    %v81 = vand.u32 %v56, 4294901760
    %82 = vmatpush.msra.mxu0 %v81
    %v83 = vand.u32 %v55, 4294901760
    %84 = vmatpush.msra.mxu0 %v83
    %v85 = vand.u32 %v54, 4294901760
    %86 = vmatpush.msra.mxu0 %v85
    %v87 = vand.u32 %v53, 4294901760
    %88 = vmatpush.msra.mxu0 %v87
    %v89 = vand.u32 %v52, 4294901760
    %90 = vmatpush.msra.mxu0 %v89
    %v91 = vand.u32 %v51, 4294901760
    %92 = vmatpush.msra.mxu0 %v91
    %v93 = vand.u32 %v50, 4294901760
    %94 = vmatpush.msra.mxu0 %v93
    %v95 = vand.u32 %v49, 4294901760
    %96 = vmatpush.msra.mxu0 %v95
    %v97 = vand.u32 %v48, 4294901760
    %v98 = vsub.f32 %v48, %v97
    %v99 = vand.u32 %v98, 4294901760
    %v100 = vsub.f32 %v98, %v99
    %v101 = vand.u32 %v100, 4294901760
    %102 = vmatmul.f32.gmra.mxu0 %v101
    %v103 = vpop.f32.mrf.mxu0
    %v104 = vadd.f32 0.0, %v103
    %105 = vdwg.mxu0
    %v106 = vand.u32 %v64, 4294901760
    %v107 = vsub.f32 %v64, %v106
    %v108 = vand.u32 %v107, 4294901760
    %v109 = vsub.f32 %v107, %v108
    %v110 = vand.u32 %v109, 4294901760
    %111 = vmatpush.msra.mxu0 %v110
    %v112 = vand.u32 %v63, 4294901760
    %v113 = vsub.f32 %v63, %v112
    %v114 = vand.u32 %v113, 4294901760
    %v115 = vsub.f32 %v113, %v114
    %v116 = vand.u32 %v115, 4294901760
    %117 = vmatpush.msra.mxu0 %v116
    %v118 = vand.u32 %v62, 4294901760
    %v119 = vsub.f32 %v62, %v118
    %v120 = vand.u32 %v119, 4294901760
    %v121 = vsub.f32 %v119, %v120
    %v122 = vand.u32 %v121, 4294901760
    %123 = vmatpush.msra.mxu0 %v122
    %v124 = vand.u32 %v61, 4294901760
    %v125 = vsub.f32 %v61, %v124
    %v126 = vand.u32 %v125, 4294901760
    %v127 = vsub.f32 %v125, %v126
    %v128 = vand.u32 %v127, 4294901760
    %129 = vmatpush.msra.mxu0 %v128
    %v130 = vand.u32 %v60, 4294901760
    %v131 = vsub.f32 %v60, %v130
    %v132 = vand.u32 %v131, 4294901760
    %v133 = vsub.f32 %v131, %v132
    %v134 = vand.u32 %v133, 4294901760
    %135 = vmatpush.msra.mxu0 %v134
    %v136 = vand.u32 %v59, 4294901760
    %v137 = vsub.f32 %v59, %v136
    %v138 = vand.u32 %v137, 4294901760
    %v139 = vsub.f32 %v137, %v138
    %v140 = vand.u32 %v139, 4294901760
    %141 = vmatpush.msra.mxu0 %v140
    %v142 = vand.u32 %v58, 4294901760
    %v143 = vsub.f32 %v58, %v142
    %v144 = vand.u32 %v143, 4294901760
    %v145 = vsub.f32 %v143, %v144
    %v146 = vand.u32 %v145, 4294901760
    %147 = vmatpush.msra.mxu0 %v146
    %v148 = vand.u32 %v57, 4294901760
    %v149 = vsub.f32 %v57, %v148
    %v150 = vand.u32 %v149, 4294901760
    %v151 = vsub.f32 %v149, %v150
    %v152 = vand.u32 %v151, 4294901760
    %153 = vmatpush.msra.mxu0 %v152
    %v154 = vand.u32 %v56, 4294901760
    %v155 = vsub.f32 %v56, %v154
    %v156 = vand.u32 %v155, 4294901760
    %v157 = vsub.f32 %v155, %v156
    %v158 = vand.u32 %v157, 4294901760
    %159 = vmatpush.msra.mxu0 %v158
    %v160 = vand.u32 %v55, 4294901760
    %v161 = vsub.f32 %v55, %v160
    %v162 = vand.u32 %v161, 4294901760
    %v163 = vsub.f32 %v161, %v162
    %v164 = vand.u32 %v163, 4294901760
    %165 = vmatpush.msra.mxu0 %v164
    %v166 = vand.u32 %v54, 4294901760
    %v167 = vsub.f32 %v54, %v166
    %v168 = vand.u32 %v167, 4294901760
    %v169 = vsub.f32 %v167, %v168
    %v170 = vand.u32 %v169, 4294901760
    %171 = vmatpush.msra.mxu0 %v170
    %v172 = vand.u32 %v53, 4294901760
    %v173 = vsub.f32 %v53, %v172
    %v174 = vand.u32 %v173, 4294901760
    %v175 = vsub.f32 %v173, %v174
    %v176 = vand.u32 %v175, 4294901760
    %177 = vmatpush.msra.mxu0 %v176
    %v178 = vand.u32 %v52, 4294901760
    %v179 = vsub.f32 %v52, %v178
    %v180 = vand.u32 %v179, 4294901760
    %v181 = vsub.f32 %v179, %v180
    %v182 = vand.u32 %v181, 4294901760
    %183 = vmatpush.msra.mxu0 %v182
    %v184 = vand.u32 %v51, 4294901760
    %v185 = vsub.f32 %v51, %v184
    %v186 = vand.u32 %v185, 4294901760
    %v187 = vsub.f32 %v185, %v186
    %v188 = vand.u32 %v187, 4294901760
    %189 = vmatpush.msra.mxu0 %v188
    %v190 = vand.u32 %v50, 4294901760
    %v191 = vsub.f32 %v50, %v190
    %v192 = vand.u32 %v191, 4294901760
    %v193 = vsub.f32 %v191, %v192
    %v194 = vand.u32 %v193, 4294901760
    %195 = vmatpush.msra.mxu0 %v194
    %v196 = vand.u32 %v49, 4294901760
    %v197 = vsub.f32 %v49, %v196
    %v198 = vand.u32 %v197, 4294901760
    %v199 = vsub.f32 %v197, %v198
    %v200 = vand.u32 %v199, 4294901760
    %201 = vmatpush.msra.mxu0 %v200
    %v202 = vand.u32 %v48, 4294901760
    %203 = vmatmul.f32.gmra.mxu0 %v202
    %v204 = vpop.f32.mrf.mxu0
    %v205 = vadd.f32 %v104, %v204
    %206 = vdwg.mxu0
    %v207 = vand.u32 %v64, 4294901760
    %v208 = vsub.f32 %v64, %v207
    %209 = vmatpush.msra.mxu0 %v208
    %v210 = vand.u32 %v63, 4294901760
    %v211 = vsub.f32 %v63, %v210
    %212 = vmatpush.msra.mxu0 %v211
    %v213 = vand.u32 %v62, 4294901760
    %v214 = vsub.f32 %v62, %v213
    %215 = vmatpush.msra.mxu0 %v214
    %v216 = vand.u32 %v61, 4294901760
    %v217 = vsub.f32 %v61, %v216
    %218 = vmatpush.msra.mxu0 %v217
    %v219 = vand.u32 %v60, 4294901760
    %v220 = vsub.f32 %v60, %v219
    %221 = vmatpush.msra.mxu0 %v220
    %v222 = vand.u32 %v59, 4294901760
    %v223 = vsub.f32 %v59, %v222
    %224 = vmatpush.msra.mxu0 %v223
    %v225 = vand.u32 %v58, 4294901760
    %v226 = vsub.f32 %v58, %v225
    %227 = vmatpush.msra.mxu0 %v226
    %v228 = vand.u32 %v57, 4294901760
    %v229 = vsub.f32 %v57, %v228
    %230 = vmatpush.msra.mxu0 %v229
    %v231 = vand.u32 %v56, 4294901760
    %v232 = vsub.f32 %v56, %v231
    %233 = vmatpush.msra.mxu0 %v232
    %v234 = vand.u32 %v55, 4294901760
    %v235 = vsub.f32 %v55, %v234
    %236 = vmatpush.msra.mxu0 %v235
    %v237 = vand.u32 %v54, 4294901760
    %v238 = vsub.f32 %v54, %v237
    %239 = vmatpush.msra.mxu0 %v238
    %v240 = vand.u32 %v53, 4294901760
    %v241 = vsub.f32 %v53, %v240
    %242 = vmatpush.msra.mxu0 %v241
    %v243 = vand.u32 %v52, 4294901760
    %v244 = vsub.f32 %v52, %v243
    %245 = vmatpush.msra.mxu0 %v244
    %v246 = vand.u32 %v51, 4294901760
    %v247 = vsub.f32 %v51, %v246
    %248 = vmatpush.msra.mxu0 %v247
    %v249 = vand.u32 %v50, 4294901760
    %v250 = vsub.f32 %v50, %v249
    %251 = vmatpush.msra.mxu0 %v250
    %v252 = vand.u32 %v49, 4294901760
    %v253 = vsub.f32 %v49, %v252
    %254 = vmatpush.msra.mxu0 %v253
    %v255 = vand.u32 %v48, 4294901760
    %v256 = vsub.f32 %v48, %v255
    %257 = vmatmul.f32.gmra.mxu0 %v256
    %v258 = vpop.f32.mrf.mxu0
    %v259 = vadd.f32 %v205, %v258
    %260 = vdwg.mxu0
    %v261 = vand.u32 %v64, 4294901760
    %262 = vmatpush.msra.mxu0 %v261
    %v263 = vand.u32 %v63, 4294901760
    %264 = vmatpush.msra.mxu0 %v263
    %v265 = vand.u32 %v62, 4294901760
    %266 = vmatpush.msra.mxu0 %v265
    %v267 = vand.u32 %v61, 4294901760
    %268 = vmatpush.msra.mxu0 %v267
    %v269 = vand.u32 %v60, 4294901760
    %270 = vmatpush.msra.mxu0 %v269
    %v271 = vand.u32 %v59, 4294901760
    %272 = vmatpush.msra.mxu0 %v271
    %v273 = vand.u32 %v58, 4294901760
    %274 = vmatpush.msra.mxu0 %v273
    %v275 = vand.u32 %v57, 4294901760
    %276 = vmatpush.msra.mxu0 %v275
    %v277 = vand.u32 %v56, 4294901760
    %278 = vmatpush.msra.mxu0 %v277
    %v279 = vand.u32 %v55, 4294901760
    %280 = vmatpush.msra.mxu0 %v279
    %v281 = vand.u32 %v54, 4294901760
    %282 = vmatpush.msra.mxu0 %v281
    %v283 = vand.u32 %v53, 4294901760
    %284 = vmatpush.msra.mxu0 %v283
    %v285 = vand.u32 %v52, 4294901760
    %286 = vmatpush.msra.mxu0 %v285
    %v287 = vand.u32 %v51, 4294901760
    %288 = vmatpush.msra.mxu0 %v287
    %v289 = vand.u32 %v50, 4294901760
    %290 = vmatpush.msra.mxu0 %v289
    %v291 = vand.u32 %v49, 4294901760
    %292 = vmatpush.msra.mxu0 %v291
    %v293 = vand.u32 %v48, 4294901760
    %v294 = vsub.f32 %v48, %v293
    %v295 = vand.u32 %v294, 4294901760
    %296 = vmatmul.f32.gmra.mxu0 %v295
    %v297 = vpop.f32.mrf.mxu0
    %v298 = vadd.f32 %v259, %v297
    %299 = vdwg.mxu0
    %v300 = vand.u32 %v64, 4294901760
    %v301 = vsub.f32 %v64, %v300
    %v302 = vand.u32 %v301, 4294901760
    %303 = vmatpush.msra.mxu0 %v302
    %v304 = vand.u32 %v63, 4294901760
    %v305 = vsub.f32 %v63, %v304
    %v306 = vand.u32 %v305, 4294901760
    %307 = vmatpush.msra.mxu0 %v306
    %v308 = vand.u32 %v62, 4294901760
    %v309 = vsub.f32 %v62, %v308
    %v310 = vand.u32 %v309, 4294901760
    %311 = vmatpush.msra.mxu0 %v310
    %v312 = vand.u32 %v61, 4294901760
    %v313 = vsub.f32 %v61, %v312
    %v314 = vand.u32 %v313, 4294901760
    %315 = vmatpush.msra.mxu0 %v314
    %v316 = vand.u32 %v60, 4294901760
    %v317 = vsub.f32 %v60, %v316
    %v318 = vand.u32 %v317, 4294901760
    %319 = vmatpush.msra.mxu0 %v318
    %v320 = vand.u32 %v59, 4294901760
    %v321 = vsub.f32 %v59, %v320
    %v322 = vand.u32 %v321, 4294901760
    %323 = vmatpush.msra.mxu0 %v322
    %v324 = vand.u32 %v58, 4294901760
    %v325 = vsub.f32 %v58, %v324
    %v326 = vand.u32 %v325, 4294901760
    %327 = vmatpush.msra.mxu0 %v326
    %v328 = vand.u32 %v57, 4294901760
    %v329 = vsub.f32 %v57, %v328
    %v330 = vand.u32 %v329, 4294901760
    %331 = vmatpush.msra.mxu0 %v330
    %v332 = vand.u32 %v56, 4294901760
    %v333 = vsub.f32 %v56, %v332
    %v334 = vand.u32 %v333, 4294901760
    %335 = vmatpush.msra.mxu0 %v334
    %v336 = vand.u32 %v55, 4294901760
    %v337 = vsub.f32 %v55, %v336
    %v338 = vand.u32 %v337, 4294901760
    %339 = vmatpush.msra.mxu0 %v338
    %v340 = vand.u32 %v54, 4294901760
    %v341 = vsub.f32 %v54, %v340
    %v342 = vand.u32 %v341, 4294901760
    %343 = vmatpush.msra.mxu0 %v342
    %v344 = vand.u32 %v53, 4294901760
    %v345 = vsub.f32 %v53, %v344
    %v346 = vand.u32 %v345, 4294901760
    %347 = vmatpush.msra.mxu0 %v346
    %v348 = vand.u32 %v52, 4294901760
    %v349 = vsub.f32 %v52, %v348
    %v350 = vand.u32 %v349, 4294901760
    %351 = vmatpush.msra.mxu0 %v350
    %v352 = vand.u32 %v51, 4294901760
    %v353 = vsub.f32 %v51, %v352
    %v354 = vand.u32 %v353, 4294901760
    %355 = vmatpush.msra.mxu0 %v354
    %v356 = vand.u32 %v50, 4294901760
    %v357 = vsub.f32 %v50, %v356
    %v358 = vand.u32 %v357, 4294901760
    %359 = vmatpush.msra.mxu0 %v358
    %v360 = vand.u32 %v49, 4294901760
    %v361 = vsub.f32 %v49, %v360
    %v362 = vand.u32 %v361, 4294901760
    %363 = vmatpush.msra.mxu0 %v362
    %v364 = vand.u32 %v48, 4294901760
    %365 = vmatmul.f32.gmra.mxu0 %v364
    %v366 = vpop.f32.mrf.mxu0
    %v367 = vadd.f32 %v298, %v366
    %368 = vdwg.mxu0
    %v369 = vand.u32 %v64, 4294901760
    %370 = vmatpush.msra.mxu0 %v369
    %v371 = vand.u32 %v63, 4294901760
    %372 = vmatpush.msra.mxu0 %v371
    %v373 = vand.u32 %v62, 4294901760
    %374 = vmatpush.msra.mxu0 %v373
    %v375 = vand.u32 %v61, 4294901760
    %376 = vmatpush.msra.mxu0 %v375
    %v377 = vand.u32 %v60, 4294901760
    %378 = vmatpush.msra.mxu0 %v377
    %v379 = vand.u32 %v59, 4294901760
    %380 = vmatpush.msra.mxu0 %v379
    %v381 = vand.u32 %v58, 4294901760
    %382 = vmatpush.msra.mxu0 %v381
    %v383 = vand.u32 %v57, 4294901760
    %384 = vmatpush.msra.mxu0 %v383
    %v385 = vand.u32 %v56, 4294901760
    %386 = vmatpush.msra.mxu0 %v385
    %v387 = vand.u32 %v55, 4294901760
    %388 = vmatpush.msra.mxu0 %v387
    %v389 = vand.u32 %v54, 4294901760
    %390 = vmatpush.msra.mxu0 %v389
    %v391 = vand.u32 %v53, 4294901760
    %392 = vmatpush.msra.mxu0 %v391
    %v393 = vand.u32 %v52, 4294901760
    %394 = vmatpush.msra.mxu0 %v393
    %v395 = vand.u32 %v51, 4294901760
    %396 = vmatpush.msra.mxu0 %v395
    %v397 = vand.u32 %v50, 4294901760
    %398 = vmatpush.msra.mxu0 %v397
    %v399 = vand.u32 %v49, 4294901760
    %400 = vmatpush.msra.mxu0 %v399
    %v401 = vand.u32 %v48, 4294901760
    %402 = vmatmul.f32.gmra.mxu0 %v401
    %v403 = vpop.f32.mrf.mxu0
    %v404 = vadd.f32 %v367, %v403
    %405 = vdwg.mxu0
    %v406 = vmul.f32 %v404, 0.03125
    %v407 = vsub.f32 %v48, %v406
    %v408 = vmul.f32 %v407, %v407
    %v409 = vand.u32 %v64, 4294901760
    %410 = vmatpush.msra.mxu0 %v409
    %v411 = vand.u32 %v63, 4294901760
    %412 = vmatpush.msra.mxu0 %v411
    %v413 = vand.u32 %v62, 4294901760
    %414 = vmatpush.msra.mxu0 %v413
    %v415 = vand.u32 %v61, 4294901760
    %416 = vmatpush.msra.mxu0 %v415
    %v417 = vand.u32 %v60, 4294901760
    %418 = vmatpush.msra.mxu0 %v417
    %v419 = vand.u32 %v59, 4294901760
    %420 = vmatpush.msra.mxu0 %v419
    %v421 = vand.u32 %v58, 4294901760
    %422 = vmatpush.msra.mxu0 %v421
    %v423 = vand.u32 %v57, 4294901760
    %424 = vmatpush.msra.mxu0 %v423
    %v425 = vand.u32 %v56, 4294901760
    %426 = vmatpush.msra.mxu0 %v425
    %v427 = vand.u32 %v55, 4294901760
    %428 = vmatpush.msra.mxu0 %v427
    %v429 = vand.u32 %v54, 4294901760
    %430 = vmatpush.msra.mxu0 %v429
    %v431 = vand.u32 %v53, 4294901760
    %432 = vmatpush.msra.mxu0 %v431
    %v433 = vand.u32 %v52, 4294901760
    %434 = vmatpush.msra.mxu0 %v433
    %v435 = vand.u32 %v51, 4294901760
    %436 = vmatpush.msra.mxu0 %v435
    %v437 = vand.u32 %v50, 4294901760
    %438 = vmatpush.msra.mxu0 %v437
    %v439 = vand.u32 %v49, 4294901760
    %440 = vmatpush.msra.mxu0 %v439
    %v441 = vand.u32 %v408, 4294901760
    %v442 = vsub.f32 %v408, %v441
    %v443 = vand.u32 %v442, 4294901760
    %v444 = vsub.f32 %v442, %v443
    %v445 = vand.u32 %v444, 4294901760
    %446 = vmatmul.f32.gmra.mxu0 %v445
    %v447 = vpop.f32.mrf.mxu0
    %v448 = vadd.f32 0.0, %v447
    %449 = vdwg.mxu0
    %v450 = vand.u32 %v64, 4294901760
    %v451 = vsub.f32 %v64, %v450
    %v452 = vand.u32 %v451, 4294901760
    %v453 = vsub.f32 %v451, %v452
    %v454 = vand.u32 %v453, 4294901760
    %455 = vmatpush.msra.mxu0 %v454
    %v456 = vand.u32 %v63, 4294901760
    %v457 = vsub.f32 %v63, %v456
    %v458 = vand.u32 %v457, 4294901760
    %v459 = vsub.f32 %v457, %v458
    %v460 = vand.u32 %v459, 4294901760
    %461 = vmatpush.msra.mxu0 %v460
    %v462 = vand.u32 %v62, 4294901760
    %v463 = vsub.f32 %v62, %v462
    %v464 = vand.u32 %v463, 4294901760
    %v465 = vsub.f32 %v463, %v464
    %v466 = vand.u32 %v465, 4294901760
    %467 = vmatpush.msra.mxu0 %v466
    %v468 = vand.u32 %v61, 4294901760
    %v469 = vsub.f32 %v61, %v468
    %v470 = vand.u32 %v469, 4294901760
    %v471 = vsub.f32 %v469, %v470
    %v472 = vand.u32 %v471, 4294901760
    %473 = vmatpush.msra.mxu0 %v472
    %v474 = vand.u32 %v60, 4294901760
    %v475 = vsub.f32 %v60, %v474
    %v476 = vand.u32 %v475, 4294901760
    %v477 = vsub.f32 %v475, %v476
    %v478 = vand.u32 %v477, 4294901760
    %479 = vmatpush.msra.mxu0 %v478
    %v480 = vand.u32 %v59, 4294901760
    %v481 = vsub.f32 %v59, %v480
    %v482 = vand.u32 %v481, 4294901760
    %v483 = vsub.f32 %v481, %v482
    %v484 = vand.u32 %v483, 4294901760
    %485 = vmatpush.msra.mxu0 %v484
    %v486 = vand.u32 %v58, 4294901760
    %v487 = vsub.f32 %v58, %v486
    %v488 = vand.u32 %v487, 4294901760
    %v489 = vsub.f32 %v487, %v488
    %v490 = vand.u32 %v489, 4294901760
    %491 = vmatpush.msra.mxu0 %v490
    %v492 = vand.u32 %v57, 4294901760
    %v493 = vsub.f32 %v57, %v492
    %v494 = vand.u32 %v493, 4294901760
    %v495 = vsub.f32 %v493, %v494
    %v496 = vand.u32 %v495, 4294901760
    %497 = vmatpush.msra.mxu0 %v496
    %v498 = vand.u32 %v56, 4294901760
    %v499 = vsub.f32 %v56, %v498
    %v500 = vand.u32 %v499, 4294901760
    %v501 = vsub.f32 %v499, %v500
    %v502 = vand.u32 %v501, 4294901760
    %503 = vmatpush.msra.mxu0 %v502
    %v504 = vand.u32 %v55, 4294901760
    %v505 = vsub.f32 %v55, %v504
    %v506 = vand.u32 %v505, 4294901760
    %v507 = vsub.f32 %v505, %v506
    %v508 = vand.u32 %v507, 4294901760
    %509 = vmatpush.msra.mxu0 %v508
    %v510 = vand.u32 %v54, 4294901760
    %v511 = vsub.f32 %v54, %v510
    %v512 = vand.u32 %v511, 4294901760
    %v513 = vsub.f32 %v511, %v512
    %v514 = vand.u32 %v513, 4294901760
    %515 = vmatpush.msra.mxu0 %v514
    %v516 = vand.u32 %v53, 4294901760
    %v517 = vsub.f32 %v53, %v516
    %v518 = vand.u32 %v517, 4294901760
    %v519 = vsub.f32 %v517, %v518
    %v520 = vand.u32 %v519, 4294901760
    %521 = vmatpush.msra.mxu0 %v520
    %v522 = vand.u32 %v52, 4294901760
    %v523 = vsub.f32 %v52, %v522
    %v524 = vand.u32 %v523, 4294901760
    %v525 = vsub.f32 %v523, %v524
    %v526 = vand.u32 %v525, 4294901760
    %527 = vmatpush.msra.mxu0 %v526
    %v528 = vand.u32 %v51, 4294901760
    %v529 = vsub.f32 %v51, %v528
    %v530 = vand.u32 %v529, 4294901760
    %v531 = vsub.f32 %v529, %v530
    %v532 = vand.u32 %v531, 4294901760
    %533 = vmatpush.msra.mxu0 %v532
    %v534 = vand.u32 %v50, 4294901760
    %v535 = vsub.f32 %v50, %v534
    %v536 = vand.u32 %v535, 4294901760
    %v537 = vsub.f32 %v535, %v536
    %v538 = vand.u32 %v537, 4294901760
    %539 = vmatpush.msra.mxu0 %v538
    %v540 = vand.u32 %v49, 4294901760
    %v541 = vsub.f32 %v49, %v540
    %v542 = vand.u32 %v541, 4294901760
    %v543 = vsub.f32 %v541, %v542
    %v544 = vand.u32 %v543, 4294901760
    %545 = vmatpush.msra.mxu0 %v544
    %v546 = vand.u32 %v408, 4294901760
    %547 = vmatmul.f32.gmra.mxu0 %v546
    %v548 = vpop.f32.mrf.mxu0
    %v549 = vadd.f32 %v448, %v548
    %550 = vdwg.mxu0
    %v551 = vand.u32 %v64, 4294901760
    %v552 = vsub.f32 %v64, %v551
    %553 = vmatpush.msra.mxu0 %v552
    %v554 = vand.u32 %v63, 4294901760
    %v555 = vsub.f32 %v63, %v554
    %556 = vmatpush.msra.mxu0 %v555
    %v557 = vand.u32 %v62, 4294901760
    %v558 = vsub.f32 %v62, %v557
    %559 = vmatpush.msra.mxu0 %v558
    %v560 = vand.u32 %v61, 4294901760
    %v561 = vsub.f32 %v61, %v560
    %562 = vmatpush.msra.mxu0 %v561
    %v563 = vand.u32 %v60, 4294901760
    %v564 = vsub.f32 %v60, %v563
    %565 = vmatpush.msra.mxu0 %v564
    %v566 = vand.u32 %v59, 4294901760
    %v567 = vsub.f32 %v59, %v566
    %568 = vmatpush.msra.mxu0 %v567
    %v569 = vand.u32 %v58, 4294901760
    %v570 = vsub.f32 %v58, %v569
    %571 = vmatpush.msra.mxu0 %v570
    %v572 = vand.u32 %v57, 4294901760
    %v573 = vsub.f32 %v57, %v572
    %574 = vmatpush.msra.mxu0 %v573
    %v575 = vand.u32 %v56, 4294901760
    %v576 = vsub.f32 %v56, %v575
    %577 = vmatpush.msra.mxu0 %v576
    %v578 = vand.u32 %v55, 4294901760
    %v579 = vsub.f32 %v55, %v578
    %580 = vmatpush.msra.mxu0 %v579
    %v581 = vand.u32 %v54, 4294901760
    %v582 = vsub.f32 %v54, %v581
    %583 = vmatpush.msra.mxu0 %v582
    %v584 = vand.u32 %v53, 4294901760
    %v585 = vsub.f32 %v53, %v584
    %586 = vmatpush.msra.mxu0 %v585
    %v587 = vand.u32 %v52, 4294901760
    %v588 = vsub.f32 %v52, %v587
    %589 = vmatpush.msra.mxu0 %v588
    %v590 = vand.u32 %v51, 4294901760
    %v591 = vsub.f32 %v51, %v590
    %592 = vmatpush.msra.mxu0 %v591
    %v593 = vand.u32 %v50, 4294901760
    %v594 = vsub.f32 %v50, %v593
    %595 = vmatpush.msra.mxu0 %v594
    %v596 = vand.u32 %v49, 4294901760
    %v597 = vsub.f32 %v49, %v596
    %598 = vmatpush.msra.mxu0 %v597
    %v599 = vand.u32 %v408, 4294901760
    %v600 = vsub.f32 %v408, %v599
    %601 = vmatmul.f32.gmra.mxu0 %v600
    %v602 = vpop.f32.mrf.mxu0
    %v603 = vadd.f32 %v549, %v602
    %604 = vdwg.mxu0
    %v605 = vand.u32 %v64, 4294901760
    %606 = vmatpush.msra.mxu0 %v605
    %v607 = vand.u32 %v63, 4294901760
    %608 = vmatpush.msra.mxu0 %v607
    %v609 = vand.u32 %v62, 4294901760
    %610 = vmatpush.msra.mxu0 %v609
    %v611 = vand.u32 %v61, 4294901760
    %612 = vmatpush.msra.mxu0 %v611
    %v613 = vand.u32 %v60, 4294901760
    %614 = vmatpush.msra.mxu0 %v613
    %v615 = vand.u32 %v59, 4294901760
    %616 = vmatpush.msra.mxu0 %v615
    %v617 = vand.u32 %v58, 4294901760
    %618 = vmatpush.msra.mxu0 %v617
    %v619 = vand.u32 %v57, 4294901760
    %620 = vmatpush.msra.mxu0 %v619
    %v621 = vand.u32 %v56, 4294901760
    %622 = vmatpush.msra.mxu0 %v621
    %v623 = vand.u32 %v55, 4294901760
    %624 = vmatpush.msra.mxu0 %v623
    %v625 = vand.u32 %v54, 4294901760
    %626 = vmatpush.msra.mxu0 %v625
    %v627 = vand.u32 %v53, 4294901760
    %628 = vmatpush.msra.mxu0 %v627
    %v629 = vand.u32 %v52, 4294901760
    %630 = vmatpush.msra.mxu0 %v629
    %v631 = vand.u32 %v51, 4294901760
    %632 = vmatpush.msra.mxu0 %v631
    %v633 = vand.u32 %v50, 4294901760
    %634 = vmatpush.msra.mxu0 %v633
    %v635 = vand.u32 %v49, 4294901760
    %636 = vmatpush.msra.mxu0 %v635
    %v637 = vand.u32 %v408, 4294901760
    %v638 = vsub.f32 %v408, %v637
    %v639 = vand.u32 %v638, 4294901760
    %640 = vmatmul.f32.gmra.mxu0 %v639
    %v641 = vpop.f32.mrf.mxu0
    %v642 = vadd.f32 %v603, %v641
    %643 = vdwg.mxu0
    %v644 = vand.u32 %v64, 4294901760
    %v645 = vsub.f32 %v64, %v644
    %v646 = vand.u32 %v645, 4294901760
    %647 = vmatpush.msra.mxu0 %v646
    %v648 = vand.u32 %v63, 4294901760
    %v649 = vsub.f32 %v63, %v648
    %v650 = vand.u32 %v649, 4294901760
    %651 = vmatpush.msra.mxu0 %v650
    %v652 = vand.u32 %v62, 4294901760
    %v653 = vsub.f32 %v62, %v652
    %v654 = vand.u32 %v653, 4294901760
    %655 = vmatpush.msra.mxu0 %v654
    %v656 = vand.u32 %v61, 4294901760
    %v657 = vsub.f32 %v61, %v656
    %v658 = vand.u32 %v657, 4294901760
    %659 = vmatpush.msra.mxu0 %v658
    %v660 = vand.u32 %v60, 4294901760
    %v661 = vsub.f32 %v60, %v660
    %v662 = vand.u32 %v661, 4294901760
    %663 = vmatpush.msra.mxu0 %v662
    %v664 = vand.u32 %v59, 4294901760
    %v665 = vsub.f32 %v59, %v664
    %v666 = vand.u32 %v665, 4294901760
    %667 = vmatpush.msra.mxu0 %v666
    %v668 = vand.u32 %v58, 4294901760
    %v669 = vsub.f32 %v58, %v668
    %v670 = vand.u32 %v669, 4294901760
    %671 = vmatpush.msra.mxu0 %v670
    %v672 = vand.u32 %v57, 4294901760
    %v673 = vsub.f32 %v57, %v672
    %v674 = vand.u32 %v673, 4294901760
    %675 = vmatpush.msra.mxu0 %v674
    %v676 = vand.u32 %v56, 4294901760
    %v677 = vsub.f32 %v56, %v676
    %v678 = vand.u32 %v677, 4294901760
    %679 = vmatpush.msra.mxu0 %v678
    %v680 = vand.u32 %v55, 4294901760
    %v681 = vsub.f32 %v55, %v680
    %v682 = vand.u32 %v681, 4294901760
    %683 = vmatpush.msra.mxu0 %v682
    %v684 = vand.u32 %v54, 4294901760
    %v685 = vsub.f32 %v54, %v684
    %v686 = vand.u32 %v685, 4294901760
    %687 = vmatpush.msra.mxu0 %v686
    %v688 = vand.u32 %v53, 4294901760
    %v689 = vsub.f32 %v53, %v688
    %v690 = vand.u32 %v689, 4294901760
    %691 = vmatpush.msra.mxu0 %v690
    %v692 = vand.u32 %v52, 4294901760
    %v693 = vsub.f32 %v52, %v692
    %v694 = vand.u32 %v693, 4294901760
    %695 = vmatpush.msra.mxu0 %v694
    %v696 = vand.u32 %v51, 4294901760
    %v697 = vsub.f32 %v51, %v696
    %v698 = vand.u32 %v697, 4294901760
    %699 = vmatpush.msra.mxu0 %v698
    %v700 = vand.u32 %v50, 4294901760
    %v701 = vsub.f32 %v50, %v700
    %v702 = vand.u32 %v701, 4294901760
    %703 = vmatpush.msra.mxu0 %v702
    %v704 = vand.u32 %v49, 4294901760
    %v705 = vsub.f32 %v49, %v704
    %v706 = vand.u32 %v705, 4294901760
    %707 = vmatpush.msra.mxu0 %v706
    %v708 = vand.u32 %v408, 4294901760
    %709 = vmatmul.f32.gmra.mxu0 %v708
    %v710 = vpop.f32.mrf.mxu0
    %v711 = vadd.f32 %v642, %v710
    %712 = vdwg.mxu0
    %v713 = vand.u32 %v64, 4294901760
    %714 = vmatpush.msra.mxu0 %v713
    %v715 = vand.u32 %v63, 4294901760
    %716 = vmatpush.msra.mxu0 %v715
    %v717 = vand.u32 %v62, 4294901760
    %718 = vmatpush.msra.mxu0 %v717
    %v719 = vand.u32 %v61, 4294901760
    %720 = vmatpush.msra.mxu0 %v719
    %v721 = vand.u32 %v60, 4294901760
    %722 = vmatpush.msra.mxu0 %v721
    %v723 = vand.u32 %v59, 4294901760
    %724 = vmatpush.msra.mxu0 %v723
    %v725 = vand.u32 %v58, 4294901760
    %726 = vmatpush.msra.mxu0 %v725
    %v727 = vand.u32 %v57, 4294901760
    %728 = vmatpush.msra.mxu0 %v727
    %v729 = vand.u32 %v56, 4294901760
    %730 = vmatpush.msra.mxu0 %v729
    %v731 = vand.u32 %v55, 4294901760
    %732 = vmatpush.msra.mxu0 %v731
    %v733 = vand.u32 %v54, 4294901760
    %734 = vmatpush.msra.mxu0 %v733
    %v735 = vand.u32 %v53, 4294901760
    %736 = vmatpush.msra.mxu0 %v735
    %v737 = vand.u32 %v52, 4294901760
    %738 = vmatpush.msra.mxu0 %v737
    %v739 = vand.u32 %v51, 4294901760
    %740 = vmatpush.msra.mxu0 %v739
    %v741 = vand.u32 %v50, 4294901760
    %742 = vmatpush.msra.mxu0 %v741
    %v743 = vand.u32 %v49, 4294901760
    %744 = vmatpush.msra.mxu0 %v743
    %v745 = vand.u32 %v408, 4294901760
    %746 = vmatmul.f32.gmra.mxu0 %v745
    %v747 = vpop.f32.mrf.mxu0
    %v748 = vadd.f32 %v711, %v747
    %749 = vdwg.mxu0
    %v750 = vmul.f32 %v748, 0.032258064
    %v751 = vrsqrt.pop %v750
    %v752 = vmul.f32 %v751, %v750
    %v753 = vmul.f32 %v752, %v751
    %v754 = vmul.f32 0.5, %v753
    %v755 = vsub.f32 1.5, %v754
    %v756 = vmul.f32 %v751, %v755
    %v757 = vmul.f32 %v750, %v756
    %vm758 = vcmp.eq.f32.partialorder %v750, inf
    %v759 = vsel %vm758, %v750, %v757
    %vm760 = vcmp.eq.f32.partialorder %v750, 0.0
    %v761 = vand.u32 %v750, 2147483648
    %v762 = vsel %vm760, %v761, %v759
    %v763 = vld [vmem:[%s2] sm:$0x1]
    %v764 = vadd.f32 %v762, 1e-06
    %v765 = vrcp.pop %v764
    %v766 = vmul.f32 %v764, %v765
    %v767 = vsub.f32 1.0, %v766
    %v768 = vmul.f32 %v765, %v767
    %v769 = vadd.f32 %v765, %v768
    %vm770 = vweird.f32 %v764
    %vm771 = vweird.f32 %v765
    %vm772 = vmor %vm770, %vm771
    %v773 = vsel %vm772, %v765, %v769
    %v774 = vand.u32 2147483647, %v764
    %vm775 = vcmp.eq.f32.partialorder %v774, 8.507059e+37
    %v776 = vand.u32 %v764, 2147483648
    %v777 = vor.u32 1.1754944e-38, %v776
    %v778 = vsel %vm775, %v777, %v773
    %v779 = vmul.f32 %v407, %v778
    %v781 = vperm.slane %v763, 0
    %v783 = vmul.f32 %v781, %v779
    %v784 = vld [vmem:[%s3] sm:$0x1]
    %v786 = vperm.slane %v784, 0
    %v788 = vadd.f32 %v783, %v786
    %789 = vst [vmem:[#allocation7] sm:$0xf] %v788
    // Predicated region
    $region26: #{tpu_custom_call.1} parent=1 // pred_check
      _
    $region27: #{tpu_custom_call.1} parent=1 // pred_check_branch
      %791 = sbr.rel (0) target = $region29
    $region28: #{tpu_custom_call.1} parent=1 // pred_region
      %793 = vsyncadd [#allocation4], 0
      %s795 = sshll.u32 [#allocation7], 4
      %s796 = int_to_ptr.vmem [resolvable:$true] %s795
      %s797 = sshll.u32 %s4, 4
      %s798 = int_to_ptr.hbm [resolvable:$true] %s797
      %800 = dma.vmem_to_hbm [thread:$0]  %s796, 64, %s798, [#allocation4]
    $region29: #{tpu_custom_call.1} parent=1 // pred_fallthru
      _
    // Predicated region
    $region30: #{tpu_custom_call.1} parent=1 // pred_check
      _
    $region31: #{tpu_custom_call.1} parent=1 // pred_check_branch
      %802 = sbr.rel (0) target = $region33
    $region32: #{tpu_custom_call.1} parent=1 // pred_region
      %804 = dma.done [#allocation4], 64
    $region33: #{tpu_custom_call.1} parent=1 // pred_fallthru
      _
    %805 = vsyncpa [#allocation3], 1
    %806 = vsyncpa [#allocation6], 1
    %807 = vsyncpa [#allocation4], 1

</llo_original>
